<compile_context>
chip_gen: v7x
topology: tpu7x:2x2x1
jax: 0.10.0
libtpu: 0.0.40
codegen_flags: <defaults>
</compile_context>

<pallas_src>
import jax
import jax.numpy as jnp
from jax.experimental import pallas as pl
from jax.experimental.pallas import tpu as pltpu


# ----------------------------------------------------------------------------
# Kernels
# ----------------------------------------------------------------------------
def _decoder_kernel_fused(x_ref, w1_ref, w2_ref, b1_ref, b2_ref, c1_ref, c2_ref):
    """Single-pass tile: full-H contraction, fused bias + ReLU, split outputs.

    x_ref : (tm, H)   bf16/f32 input rows
    w1/w2 : (H, tn)   per-cluster weight tiles, (in, out) layout
    b1/b2 : (1, tn)   f32 bias tiles
    c1/c2 : (tm, tn)  relu(x @ w + b) tiles
    """
    x = x_ref[...]
    y1 = jnp.dot(x, w1_ref[...], preferred_element_type=jnp.float32)
    y2 = jnp.dot(x, w2_ref[...], preferred_element_type=jnp.float32)
    c1_ref[...] = jnp.maximum(y1 + b1_ref[...], 0.0).astype(c1_ref.dtype)
    c2_ref[...] = jnp.maximum(y2 + b2_ref[...], 0.0).astype(c2_ref.dtype)


def _decoder_kernel_ksplit(x_ref, w1_ref, w2_ref, b1_ref, b2_ref,
                           c1_ref, c2_ref, acc1_ref, acc2_ref):
    """K-split tile: accumulate partial products over the innermost k axis."""
    k = pl.program_id(2)

    @pl.when(k == 0)
    def _():
        acc1_ref[...] = jnp.zeros_like(acc1_ref)
        acc2_ref[...] = jnp.zeros_like(acc2_ref)

    x = x_ref[...]
    acc1_ref[...] += jnp.dot(x, w1_ref[...], preferred_element_type=jnp.float32)
    acc2_ref[...] += jnp.dot(x, w2_ref[...], preferred_element_type=jnp.float32)

    @pl.when(k == pl.num_programs(2) - 1)
    def _():
        c1_ref[...] = jnp.maximum(acc1_ref[...] + b1_ref[...], 0.0).astype(c1_ref.dtype)
        c2_ref[...] = jnp.maximum(acc2_ref[...] + b2_ref[...], 0.0).astype(c2_ref.dtype)


# ----------------------------------------------------------------------------
# Tiling / VMEM budget helpers
# ----------------------------------------------------------------------------
def _vmem_capacity_bytes():
    """Physical VMEM of the current generation; conservative v7x fallback."""
    try:
        info = pltpu.get_tpu_info()
        for attr in ("vmem_capacity_bytes", "vmem_size_bytes", "vmem_bytes"):
            v = getattr(info, attr, None)
            if v:
                return int(v)
    except Exception:
        pass
    return 64 << 20  # v7x-class VMEM (smallest of v5e/v6e/v7x)


def _tile_candidates(dim, unit, cap):
    """Divisor tiles of `dim` that are multiples of `unit`, descending; the
    full dim (always a legal block shape) is kept as a fallback."""
    hi = min(dim, cap)
    hi -= hi % unit
    cands = [c for c in range(hi, unit - 1, -unit) if dim % c == 0]
    if dim not in cands:
        cands.append(dim)
    return cands


def _choose_tiles(B, H, in_bytes, out_bytes, budget):
    """Pick (tm, tn, tk) so the double-buffered footprint fits `budget`."""
    tm_cands = _tile_candidates(B, 8, 1024)
    if B >= 16:
        # Prefer >= 2 batch tiles so both TensorCores get work on 2-TC parts.
        multi = [c for c in tm_cands if B // c >= 2]
        tm_cands = multi + [c for c in tm_cands if c not in multi]
    tn_cands = _tile_candidates(H, 128, 2048)
    # Prefer the single-pass tk == H path: it keeps the weights fully resident
    # across the batch sweep (one HBM pass over the weights).
    tk_cands = [H] + [c for c in (4096, 2048, 1024, 512) if c < H and H % c == 0]

    def footprint(tm, tn, tk, ksplit):
        per_buf = (tm * tk * in_bytes           # x tile
                   + 2 * tk * tn * in_bytes     # two weight tiles
                   + 2 * 8 * tn * 4             # two (sublane-padded) f32 bias tiles
                   + 2 * tm * tn * out_bytes)   # two output tiles
        scratch = (2 * tm * tn * 4) if ksplit else 0
        return 2 * per_buf + scratch            # x2: double-buffered pipeline

    for tk in tk_cands:
        ksplit = tk != H
        for tm in tm_cands:
            for tn in tn_cands:
                fp = footprint(tm, tn, tk, ksplit)
                if fp <= budget:
                    return tm, tn, tk, ksplit, fp
    # Last resort: smallest legal tiles even if over budget.
    tm, tn, tk = min(tm_cands), min(tn_cands), min(tk_cands)
    ksplit = tk != H
    return tm, tn, tk, ksplit, footprint(tm, tn, tk, ksplit)


# ----------------------------------------------------------------------------
# Parameter prep + forward
# ----------------------------------------------------------------------------
def prepare_decoder_params(weight, bias, *, compute_dtype=jnp.bfloat16):
    """One-time parameter prep (do this at parameter-load time, not per call).

    weight: (2H, H) PyTorch nn.Linear layout; bias: (2H,).
    Returns (w1, w2, b1, b2): per-cluster (H, H) weights in (in, out) layout
    cast to `compute_dtype`, and (1, H) f32 bias rows.  Pass
    compute_dtype=jnp.float32 for strict f32 parity with the PyTorch module.
    """
    N, H = weight.shape
    assert N == 2 * H and bias.shape == (N,)
    weight = jnp.asarray(weight)
    bias = jnp.asarray(bias)
    w1 = weight[:H, :].T.astype(compute_dtype)   # (H, H): x @ w1 == x @ W[:H].T
    w2 = weight[H:, :].T.astype(compute_dtype)   # (H, H): x @ w2 == x @ W[H:].T
    b1 = bias[:H].reshape(1, H).astype(jnp.float32)
    b2 = bias[H:].reshape(1, H).astype(jnp.float32)
    return w1, w2, b1, b2


def decoder_forward(x, w1, w2, b1, b2):
    """x: (B, H). Returns (cluster1, cluster2), each (B, H) in x.dtype."""
    B, H = x.shape
    assert w1.shape == (H, H) and w2.shape == (H, H)
    assert b1.shape == (1, H) and b2.shape == (1, H)

    out_dtype = x.dtype
    compute_dtype = w1.dtype
    x_c = x.astype(compute_dtype)

    in_bytes = jnp.dtype(compute_dtype).itemsize
    out_bytes = jnp.dtype(out_dtype).itemsize

    # Generation-aware budget: ~75% of physical VMEM, then request only what
    # the chosen tiles actually need (plus headroom) — never a blanket 64 MiB.
    budget = int(0.75 * _vmem_capacity_bytes())
    tm, tn, tk, ksplit, fp = _choose_tiles(B, H, in_bytes, out_bytes, budget)
    vmem_limit = int(min(budget, max(16 << 20, int(1.5 * fp))))

    nj = pl.cdiv(H, tn)   # per-cluster feature tiles
    ni = pl.cdiv(B, tm)   # batch tiles

    out_shapes = (jax.ShapeDtypeStruct((B, H), out_dtype),
                  jax.ShapeDtypeStruct((B, H), out_dtype))

    if not ksplit:
        # Single HBM pass over the weights: j (features) outermost, i (batch)
        # innermost -> weight & bias tiles stay resident across the i sweep;
        # only the x tile re-streams.
        grid_spec = pltpu.PrefetchScalarGridSpec(
            num_scalar_prefetch=0,
            grid=(nj, ni),
            in_specs=[
                pl.BlockSpec((tm, H), lambda j, i: (i, 0)),   # x (streams)
                pl.BlockSpec((H, tn), lambda j, i: (0, j)),   # w1 (resident over i)
                pl.BlockSpec((H, tn), lambda j, i: (0, j)),   # w2 (resident over i)
                pl.BlockSpec((1, tn), lambda j, i: (0, j)),   # b1 (resident over i)
                pl.BlockSpec((1, tn), lambda j, i: (0, j)),   # b2 (resident over i)
            ],
            out_specs=[
                pl.BlockSpec((tm, tn), lambda j, i: (i, j)),  # cluster1
                pl.BlockSpec((tm, tn), lambda j, i: (i, j)),  # cluster2
            ],
        )
        kernel = _decoder_kernel_fused
        dims = ("parallel", "parallel")
    else:
        # Large-H path: bounded tk keeps tiles MXU-shaped & VMEM-safe; the
        # innermost k axis is a reduction ("arbitrary") with f32 accumulators.
        grid_spec = pltpu.PrefetchScalarGridSpec(
            num_scalar_prefetch=0,
            grid=(nj, ni, pl.cdiv(H, tk)),
            in_specs=[
                pl.BlockSpec((tm, tk), lambda j, i, k: (i, k)),   # x
                pl.BlockSpec((tk, tn), lambda j, i, k: (k, j)),   # w1
                pl.BlockSpec((tk, tn), lambda j, i, k: (k, j)),   # w2
                pl.BlockSpec((1, tn), lambda j, i, k: (0, j)),    # b1
                pl.BlockSpec((1, tn), lambda j, i, k: (0, j)),    # b2
            ],
            out_specs=[
                pl.BlockSpec((tm, tn), lambda j, i, k: (i, j)),
                pl.BlockSpec((tm, tn), lambda j, i, k: (i, j)),
            ],
            scratch_shapes=[pltpu.VMEM((tm, tn), jnp.float32),
                            pltpu.VMEM((tm, tn), jnp.float32)],
        )
        kernel = _decoder_kernel_ksplit
        dims = ("parallel", "parallel", "arbitrary")

    # NOTE: if DMA latency is still exposed after the reorder, the x BlockSpec
    # can additionally take pipeline_mode=pl.Buffered(3) where VMEM allows.
    c1, c2 = pl.pallas_call(
        kernel,
        out_shape=out_shapes,
        grid_spec=grid_spec,
        compiler_params=pltpu.CompilerParams(
            dimension_semantics=dims,
            vmem_limit_bytes=vmem_limit,
        ),
    )(x_c, w1, w2, b1, b2)

    return c1, c2


# ----------------------------------------------------------------------------
# Self-test
# ----------------------------------------------------------------------------
if __name__ == "__main__":
    # Small shapes consistent with the module: batch=8, hidden_size=128.
    B, H = 8, 128
    key = jax.random.PRNGKey(0)
    kx, kw, kb = jax.random.split(key, 3)

    x = jax.random.normal(kx, (B, H), dtype=jnp.float32)

    # Deterministic parameter init mimicking nn.Linear default (uniform ±1/sqrt(H)).
    bound = 1.0 / (H ** 0.5)
    weight = jax.random.uniform(kw, (2 * H, H), jnp.float32, -bound, bound)
    bias = jax.random.uniform(kb, (2 * H,), jnp.float32, -bound, bound)

    # One-time parameter prep (transpose to (in, out) layout, cast to bf16).
    params = prepare_decoder_params(weight, bias, compute_dtype=jnp.bfloat16)

    c1, c2 = decoder_forward(x, *params)
    jax.block_until_ready((c1, c2))
    assert c1.shape == (B, H) and c2.shape == (B, H)

    # Reference with matching bf16 operand rounding, math in f32.
    xb = x.astype(jnp.bfloat16).astype(jnp.float32)
    wb = weight.astype(jnp.bfloat16).astype(jnp.float32)
    ref = jnp.maximum(xb @ wb.T + bias, 0.0)
    assert jnp.allclose(c1, ref[:, :H], atol=1e-3, rtol=1e-3)
    assert jnp.allclose(c2, ref[:, H:], atol=1e-3, rtol=1e-3)

    # Loose sanity check vs. the pure-f32 module semantics (bf16 rounding only).
    ref32 = jnp.maximum(x @ weight.T + bias, 0.0)
    assert jnp.allclose(c1, ref32[:, :H], atol=5e-2, rtol=5e-2)
    assert jnp.allclose(c2, ref32[:, H:], atol=5e-2, rtol=5e-2)

    print("KERNEL_OK")
</pallas_src>

<mosaic_0001>
module attributes {stable_mosaic.version = 11 : i64} {
  func.func @_decoder_kernel_fused(%arg0: i32, %arg1: i32, %arg2: memref<8x128xbf16, #tpu.memory_space<vmem>>, %arg3: memref<128x128xbf16, #tpu.memory_space<vmem>>, %arg4: memref<128x128xbf16, #tpu.memory_space<vmem>>, %arg5: memref<1x128xf32, #tpu.memory_space<vmem>>, %arg6: memref<1x128xf32, #tpu.memory_space<vmem>>, %arg7: memref<8x128xf32, #tpu.memory_space<vmem>>, %arg8: memref<8x128xf32, #tpu.memory_space<vmem>>) attributes {dimension_semantics = [#tpu.dimension_semantics<parallel>, #tpu.dimension_semantics<parallel>], iteration_bounds = array<i64: 1, 1>, scalar_prefetch = 0 : i64, scratch_operands = 0 : i64, tpu.core_type = #tpu.core_type<tc>, window_params = [{transform_indices = @transform_0, window_bounds = array<i64: 8, 128>}, {transform_indices = @transform_1, window_bounds = array<i64: 128, 128>}, {transform_indices = @transform_2, window_bounds = array<i64: 128, 128>}, {transform_indices = @transform_3, window_bounds = array<i64: 1, 128>}, {transform_indices = @transform_4, window_bounds = array<i64: 1, 128>}, {transform_indices = @transform_5, window_bounds = array<i64: 8, 128>}, {transform_indices = @transform_6, window_bounds = array<i64: 8, 128>}]} {
    %c0 = arith.constant 0 : index
    %c0_0 = arith.constant 0 : index
    %0 = vector.load %arg2[%c0, %c0_0] : memref<8x128xbf16, #tpu.memory_space<vmem>>, vector<8x128xbf16>
    %c0_1 = arith.constant 0 : index
    %c0_2 = arith.constant 0 : index
    %1 = vector.load %arg3[%c0_1, %c0_2] : memref<128x128xbf16, #tpu.memory_space<vmem>>, vector<128x128xbf16>
    %cst = arith.constant dense<0.000000e+00> : vector<8x128xf32>
    %2 = tpu.matmul %0, %1, %cst {dimension_numbers = #tpu.dot_dimension_numbers<[1], [0], [0], [1], [0, 0, 1, 1], [], []>} : vector<8x128xbf16>, vector<128x128xbf16>, vector<8x128xf32> -> vector<8x128xf32>
    %c0_3 = arith.constant 0 : index
    %c0_4 = arith.constant 0 : index
    %3 = vector.load %arg4[%c0_3, %c0_4] : memref<128x128xbf16, #tpu.memory_space<vmem>>, vector<128x128xbf16>
    %cst_5 = arith.constant dense<0.000000e+00> : vector<8x128xf32>
    %4 = tpu.matmul %0, %3, %cst_5 {dimension_numbers = #tpu.dot_dimension_numbers<[1], [0], [0], [1], [0, 0, 1, 1], [], []>} : vector<8x128xbf16>, vector<128x128xbf16>, vector<8x128xf32> -> vector<8x128xf32>
    %c0_6 = arith.constant 0 : index
    %c0_7 = arith.constant 0 : index
    %5 = vector.load %arg5[%c0_6, %c0_7] : memref<1x128xf32, #tpu.memory_space<vmem>>, vector<1x128xf32>
    %6 = vector.broadcast %5 : vector<1x128xf32> to vector<8x128xf32>
    %7 = arith.addf %2, %6 : vector<8x128xf32>
    %cst_8 = arith.constant 0.000000e+00 : f32
    %8 = vector.broadcast %cst_8 : f32 to vector<8x128xf32>
    %9 = arith.maximumf %7, %8 : vector<8x128xf32>
    %c0_9 = arith.constant 0 : index
    %c0_10 = arith.constant 0 : index
    %10 = vector.load %arg7[%c0_9, %c0_10] : memref<8x128xf32, #tpu.memory_space<vmem>>, vector<8x128xf32>
    tpu.vector_store %arg7[%c0_9, %c0_10], %9 {strides = array<i32>} : memref<8x128xf32, #tpu.memory_space<vmem>>, vector<8x128xf32>,
    %c0_11 = arith.constant 0 : index
    %c0_12 = arith.constant 0 : index
    %11 = vector.load %arg6[%c0_11, %c0_12] : memref<1x128xf32, #tpu.memory_space<vmem>>, vector<1x128xf32>
    %12 = vector.broadcast %11 : vector<1x128xf32> to vector<8x128xf32>
    %13 = arith.addf %4, %12 : vector<8x128xf32>
    %cst_13 = arith.constant 0.000000e+00 : f32
    %14 = vector.broadcast %cst_13 : f32 to vector<8x128xf32>
    %15 = arith.maximumf %13, %14 : vector<8x128xf32>
    %c0_14 = arith.constant 0 : index
    %c0_15 = arith.constant 0 : index
    %16 = vector.load %arg8[%c0_14, %c0_15] : memref<8x128xf32, #tpu.memory_space<vmem>>, vector<8x128xf32>
    tpu.vector_store %arg8[%c0_14, %c0_15], %15 {strides = array<i32>} : memref<8x128xf32, #tpu.memory_space<vmem>>, vector<8x128xf32>,
    return
  }
  func.func @transform_0(%arg0: i32, %arg1: i32) -> (i32, i32) {
    %c0_i32 = arith.constant 0 : i32
    %c0_i32_0 = arith.constant 0 : i32
    return %arg1, %c0_i32 : i32, i32
  }
  func.func @transform_1(%arg0: i32, %arg1: i32) -> (i32, i32) {
    %c0_i32 = arith.constant 0 : i32
    %c0_i32_0 = arith.constant 0 : i32
    return %c0_i32, %arg0 : i32, i32
  }
  func.func @transform_2(%arg0: i32, %arg1: i32) -> (i32, i32) {
    %c0_i32 = arith.constant 0 : i32
    %c0_i32_0 = arith.constant 0 : i32
    return %c0_i32, %arg0 : i32, i32
  }
  func.func @transform_3(%arg0: i32, %arg1: i32) -> (i32, i32) {
    %c0_i32 = arith.constant 0 : i32
    %c0_i32_0 = arith.constant 0 : i32
    return %c0_i32, %arg0 : i32, i32
  }
  func.func @transform_4(%arg0: i32, %arg1: i32) -> (i32, i32) {
    %c0_i32 = arith.constant 0 : i32
    %c0_i32_0 = arith.constant 0 : i32
    return %c0_i32, %arg0 : i32, i32
  }
  func.func @transform_5(%arg0: i32, %arg1: i32) -> (i32, i32) {
    %c0_i32 = arith.constant 0 : i32
    return %arg1, %arg0 : i32, i32
  }
  func.func @transform_6(%arg0: i32, %arg1: i32) -> (i32, i32) {
    %c0_i32 = arith.constant 0 : i32
    return %arg1, %arg0 : i32, i32
  }
}

</mosaic_0001>

<llo_original>
// kernel: tpu_custom_call.1
$region0: #{tpu_custom_call.1}
  #allocation0 [shape = 'u32[]', space=smem, size = 0x4, offset = 0x4, fixed_abs, tag = 'smem constant byte address 0x4 - core index']
  #allocation1 [shape = 'u32[144,128]{1,0:T(1,128)}', space=vmem, size = 0x12000, scoped, tag = 'internal scratch']
  %s0 = inlined_call_operand.hbm [shape: bf16[8,128], index: 0, kind: input, shape index: {}]
  %s1 = inlined_call_operand.hbm [shape: bf16[128,128], index: 1, kind: input, shape index: {}]
  %s2 = inlined_call_operand.hbm [shape: bf16[128,128], index: 2, kind: input, shape index: {}]
  %s3 = inlined_call_operand.vmem [shape: f32[1,128], index: 3, kind: input, shape index: {}]
  %s4 = inlined_call_operand.vmem [shape: f32[1,128], index: 4, kind: input, shape index: {}]
  %s5 = inlined_call_operand.hbm [shape: f32[8,128], index: 5, kind: output, shape index: {0}]
  %s6 = inlined_call_operand.hbm [shape: f32[8,128], index: 6, kind: output, shape index: {1}]
  %7 = xla_tuple %s5, %s6
  %s8 = sld [smem:[#allocation0]]
  $region50: #{tpu_custom_call.1} parent=0
    _
  %s10 = ssub.s32 1, %s8
  %s11 = scalar_select 0, %s10, %s8
  $region1: #{tpu_custom_call.1} parent=0
    #allocation2 [shape = 'u8[2048]{0}', space=vmem, size = 0x800, scoped, tag = 'input window, operand 0, single buffered']
    #allocation3 [shape = 's32[1]{0}', space=sflag, size = 0x4, scoped, tag = 'scoped memory for tpu_custom_call.1']
    #allocation4 [shape = 's32[1]{0}', space=sflag, size = 0x4, scoped, tag = 'scoped memory for tpu_custom_call.1']
    #allocation5 [shape = 'u8[32768]{0}', space=vmem, size = 0x8000, scoped, tag = 'input window, operand 1, single buffered']
    #allocation6 [shape = 's32[1]{0}', space=sflag, size = 0x4, scoped, tag = 'scoped memory for tpu_custom_call.1']
    #allocation7 [shape = 'u8[32768]{0}', space=vmem, size = 0x8000, scoped, tag = 'input window, operand 2, single buffered']
    #allocation8 [shape = 'u8[4096]{0}', space=vmem, size = 0x1000, scoped, tag = 'output window, operand 0, single buffered']
    #allocation9 [shape = 'u8[4096]{0}', space=vmem, size = 0x1000, scoped, tag = 'output window, operand 1, single buffered']
    #allocation10 [shape = 's32[1]{0}', space=sflag, size = 0x4, scoped, tag = 'scoped memory for tpu_custom_call.1']
    %12 = vsyncpa [#allocation3], 0
    %13 = vsyncpa [#allocation6], 0
    %14 = vsyncpa [#allocation4], 0
    %15 = vsyncpa [#allocation10], 0
    // Predicated region
    $region2: #{tpu_custom_call.1} parent=1 // pred_check
      _
    $region3: #{tpu_custom_call.1} parent=1 // pred_check_branch
      %17 = sbr.rel (0) target = $region5
    $region4: #{tpu_custom_call.1} parent=1 // pred_region
      %s19 = ssub.s32 64, 64
      %20 = vsyncadd [#allocation3], %s19
      %s22 = sshll.u32 [#allocation2], 4
      %s23 = int_to_ptr.vmem [resolvable:$true] %s22
      %25 = dma.hbm_to_vmem [thread:$0]  %s0, 64, %s23, [#allocation3]
    $region5: #{tpu_custom_call.1} parent=1 // pred_fallthru
      _
    // Predicated region
    $region6: #{tpu_custom_call.1} parent=1 // pred_check
      _
    $region7: #{tpu_custom_call.1} parent=1 // pred_check_branch
      %27 = sbr.rel (0) target = $region9
    $region8: #{tpu_custom_call.1} parent=1 // pred_region
      %s29 = ssub.s32 1024, 1024
      %30 = vsyncadd [#allocation6], %s29
      %s31 = sshll.u32 [#allocation5], 4
      %s32 = int_to_ptr.vmem [resolvable:$true] %s31
      %37 = dma.hbm_to_vmem [thread:$0]  %s1, 1024, %s32, [#allocation6], 64, 64, 4
    $region9: #{tpu_custom_call.1} parent=1 // pred_fallthru
      _
    // Predicated region
    $region10: #{tpu_custom_call.1} parent=1 // pred_check
      _
    $region11: #{tpu_custom_call.1} parent=1 // pred_check_branch
      %39 = sbr.rel (0) target = $region13
    $region12: #{tpu_custom_call.1} parent=1 // pred_region
      %s41 = ssub.s32 1024, 1024
      %42 = vsyncadd [#allocation6], %s41
      %s43 = sshll.u32 [#allocation7], 4
      %s44 = int_to_ptr.vmem [resolvable:$true] %s43
      %49 = dma.hbm_to_vmem [thread:$0]  %s2, 1024, %s44, [#allocation6], 64, 64, 4
    $region13: #{tpu_custom_call.1} parent=1 // pred_fallthru
      _
    // Predicated region
    $region14: #{tpu_custom_call.1} parent=1 // pred_check
      _
    $region15: #{tpu_custom_call.1} parent=1 // pred_check_branch
      %51 = sbr.rel (0) target = $region17
    $region16: #{tpu_custom_call.1} parent=1 // pred_region
      _
    $region17: #{tpu_custom_call.1} parent=1 // pred_fallthru
      _
    // Predicated region
    $region18: #{tpu_custom_call.1} parent=1 // pred_check
      _
    $region19: #{tpu_custom_call.1} parent=1 // pred_check_branch
      %53 = sbr.rel (0) target = $region21
    $region20: #{tpu_custom_call.1} parent=1 // pred_region
      _
    $region21: #{tpu_custom_call.1} parent=1 // pred_fallthru
      _
    // Predicated region
    $region22: #{tpu_custom_call.1} parent=1 // pred_check
      _
    $region23: #{tpu_custom_call.1} parent=1 // pred_check_branch
      %55 = sbr.rel (0) target = $region25
    $region24: #{tpu_custom_call.1} parent=1 // pred_region
      %56 = dma.done [#allocation3], 64
    $region25: #{tpu_custom_call.1} parent=1 // pred_fallthru
      _
    // Predicated region
    $region26: #{tpu_custom_call.1} parent=1 // pred_check
      _
    $region27: #{tpu_custom_call.1} parent=1 // pred_check_branch
      %58 = sbr.rel (0) target = $region29
    $region28: #{tpu_custom_call.1} parent=1 // pred_region
      %59 = dma.done [#allocation6], 1024
    $region29: #{tpu_custom_call.1} parent=1 // pred_fallthru
      _
    // Predicated region
    $region30: #{tpu_custom_call.1} parent=1 // pred_check
      _
    $region31: #{tpu_custom_call.1} parent=1 // pred_check_branch
      %61 = sbr.rel (0) target = $region33
    $region32: #{tpu_custom_call.1} parent=1 // pred_region
      %62 = dma.done [#allocation6], 1024
    $region33: #{tpu_custom_call.1} parent=1 // pred_fallthru
      _
    %v64 = vld [vmem:[#allocation2] sm:$0xf]
    %v65 = vld [vmem:[#allocation5] sm:$0xf]
    %v66 = vld [vmem:[#allocation5 + $0x4] sm:$0xf]
    %v67 = vld [vmem:[#allocation5 + $0x8] sm:$0xf]
    %v68 = vld [vmem:[#allocation5 + $0xc] sm:$0xf]
    %v69 = vld [vmem:[#allocation5 + $0x10] sm:$0xf]
    %v70 = vld [vmem:[#allocation5 + $0x14] sm:$0xf]
    %v71 = vld [vmem:[#allocation5 + $0x18] sm:$0xf]
    %v72 = vld [vmem:[#allocation5 + $0x1c] sm:$0xf]
    %v73 = vld [vmem:[#allocation5 + $0x20] sm:$0xf]
    %v74 = vld [vmem:[#allocation5 + $0x24] sm:$0xf]
    %v75 = vld [vmem:[#allocation5 + $0x28] sm:$0xf]
    %v76 = vld [vmem:[#allocation5 + $0x2c] sm:$0xf]
    %v77 = vld [vmem:[#allocation5 + $0x30] sm:$0xf]
    %v78 = vld [vmem:[#allocation5 + $0x34] sm:$0xf]
    %v79 = vld [vmem:[#allocation5 + $0x38] sm:$0xf]
    %v80 = vld [vmem:[#allocation5 + $0x3c] sm:$0xf]
    %v81 = vld [vmem:[#allocation7] sm:$0xf]
    %v82 = vld [vmem:[#allocation7 + $0x4] sm:$0xf]
    %v83 = vld [vmem:[#allocation7 + $0x8] sm:$0xf]
    %v84 = vld [vmem:[#allocation7 + $0xc] sm:$0xf]
    %v85 = vld [vmem:[#allocation7 + $0x10] sm:$0xf]
    %v86 = vld [vmem:[#allocation7 + $0x14] sm:$0xf]
    %v87 = vld [vmem:[#allocation7 + $0x18] sm:$0xf]
    %v88 = vld [vmem:[#allocation7 + $0x1c] sm:$0xf]
    %v89 = vld [vmem:[#allocation7 + $0x20] sm:$0xf]
    %v90 = vld [vmem:[#allocation7 + $0x24] sm:$0xf]
    %v91 = vld [vmem:[#allocation7 + $0x28] sm:$0xf]
    %v92 = vld [vmem:[#allocation7 + $0x2c] sm:$0xf]
    %v93 = vld [vmem:[#allocation7 + $0x30] sm:$0xf]
    %v94 = vld [vmem:[#allocation7 + $0x34] sm:$0xf]
    %v95 = vld [vmem:[#allocation7 + $0x38] sm:$0xf]
    %v96 = vld [vmem:[#allocation7 + $0x3c] sm:$0xf]
    %v97 = vld [vmem:[%s3] sm:$0x1]
    %v99 = vlaneseq
    %v100 = vshrl.u32 %v99, 7
    %v101 = vsub.s32 0, %v100
    %v102 = vrot.slane %v97, %v101
    %v120 = vunpack.c.l.b16 %v65
    %v121 = vunpack.c.l.b16 %v66
    %v122 = vunpack.c.l.b16 %v67
    %v123 = vunpack.c.l.b16 %v68
    %v124 = vunpack.c.l.b16 %v69
    %v125 = vunpack.c.l.b16 %v70
    %v126 = vunpack.c.l.b16 %v71
    %v127 = vunpack.c.l.b16 %v72
    %v128 = vunpack.c.l.b16 %v73
    %v129 = vunpack.c.l.b16 %v74
    %v130 = vunpack.c.l.b16 %v75
    %v131 = vunpack.c.l.b16 %v76
    %v132 = vunpack.c.l.b16 %v77
    %v133 = vunpack.c.l.b16 %v78
    %v134 = vunpack.c.l.b16 %v79
    %v135 = vunpack.c.l.b16 %v80
    %v136 = vpack.c.b16 %v121, %v120
    %v137 = vpack.c.b16 %v123, %v122
    %v138 = vpack.c.b16 %v125, %v124
    %v139 = vpack.c.b16 %v127, %v126
    %v140 = vpack.c.b16 %v129, %v128
    %v141 = vpack.c.b16 %v131, %v130
    %v142 = vpack.c.b16 %v133, %v132
    %v143 = vpack.c.b16 %v135, %v134
    %152 = vmatprep.subr.bf16.mxu0 0
    %153 = vmatpush1.bf16.msra.mxu0 %v136
    %154 = vmatprep.subr.bf16.mxu0 0
    %155 = vmatpush1.bf16.msra.mxu0 %v137
    %156 = vmatprep.subr.bf16.mxu0 0
    %157 = vmatpush1.bf16.msra.mxu0 %v138
    %158 = vmatprep.subr.bf16.mxu0 0
    %159 = vmatpush1.bf16.msra.mxu0 %v139
    %160 = vmatprep.subr.bf16.mxu0 0
    %161 = vmatpush1.bf16.msra.mxu0 %v140
    %162 = vmatprep.subr.bf16.mxu0 0
    %163 = vmatpush1.bf16.msra.mxu0 %v141
    %164 = vmatprep.subr.bf16.mxu0 0
    %165 = vmatpush1.bf16.msra.mxu0 %v142
    %166 = vmatprep.subr.bf16.mxu0 0
    %167 = vmatpush1.bf16.msra.mxu0 %v143
    %168 = vmatprep.subr.bf16.mxu0 0
    %169 = vmatpush1.bf16.msra.mxu0 0
    %170 = vmatprep.subr.bf16.mxu0 0
    %171 = vmatpush1.bf16.msra.mxu0 0
    %172 = vmatprep.subr.bf16.mxu0 0
    %173 = vmatpush1.bf16.msra.mxu0 0
    %174 = vmatprep.subr.bf16.mxu0 0
    %175 = vmatpush1.bf16.msra.mxu0 0
    %176 = vmatprep.subr.bf16.mxu0 0
    %177 = vmatpush1.bf16.msra.mxu0 0
    %178 = vmatprep.subr.bf16.mxu0 0
    %179 = vmatpush1.bf16.msra.mxu0 0
    %180 = vmatprep.subr.bf16.mxu0 0
    %181 = vmatpush1.bf16.msra.mxu0 0
    %182 = vmatprep.subr.bf16.mxu0 0
    %183 = vmatpush1.bf16.msra.mxu0 0
    %184 = vmatprep.mubr.bf16.mxu0 0
    %185 = vmatmul.mubr.bf16.gmra.mrb[0].mxu0 %v64
    %v186 = vpop.f32.mrb[0].mxu0
    %v187 = vadd.f32 %v102, %v186
    %v188 = vpop.f32.mrb[0].mxu0
    %v189 = vpop.f32.mrb[0].mxu0
    %v190 = vpop.f32.mrb[0].mxu0
    %191 = vdwg.mxu0
    %v192 = vmax.f32 %v187, 0.0
    %193 = vst [vmem:[#allocation8] sm:$0xff] %v192
    %v194 = vld [vmem:[%s4] sm:$0x1]
    %v196 = vlaneseq
    %v197 = vshrl.u32 %v196, 7
    %v198 = vsub.s32 0, %v197
    %v199 = vrot.slane %v194, %v198
    %v217 = vunpack.c.l.b16 %v81
    %v218 = vunpack.c.l.b16 %v82
    %v219 = vunpack.c.l.b16 %v83
    %v220 = vunpack.c.l.b16 %v84
    %v221 = vunpack.c.l.b16 %v85
    %v222 = vunpack.c.l.b16 %v86
    %v223 = vunpack.c.l.b16 %v87
    %v224 = vunpack.c.l.b16 %v88
    %v225 = vunpack.c.l.b16 %v89
    %v226 = vunpack.c.l.b16 %v90
    %v227 = vunpack.c.l.b16 %v91
    %v228 = vunpack.c.l.b16 %v92
    %v229 = vunpack.c.l.b16 %v93
    %v230 = vunpack.c.l.b16 %v94
    %v231 = vunpack.c.l.b16 %v95
    %v232 = vunpack.c.l.b16 %v96
    %v233 = vpack.c.b16 %v218, %v217
    %v234 = vpack.c.b16 %v220, %v219
    %v235 = vpack.c.b16 %v222, %v221
    %v236 = vpack.c.b16 %v224, %v223
    %v237 = vpack.c.b16 %v226, %v225
    %v238 = vpack.c.b16 %v228, %v227
    %v239 = vpack.c.b16 %v230, %v229
    %v240 = vpack.c.b16 %v232, %v231
    %249 = vmatprep.subr.bf16.mxu0 0
    %250 = vmatpush1.bf16.msra.mxu0 %v233
    %251 = vmatprep.subr.bf16.mxu0 0
    %252 = vmatpush1.bf16.msra.mxu0 %v234
    %253 = vmatprep.subr.bf16.mxu0 0
    %254 = vmatpush1.bf16.msra.mxu0 %v235
    %255 = vmatprep.subr.bf16.mxu0 0
    %256 = vmatpush1.bf16.msra.mxu0 %v236
    %257 = vmatprep.subr.bf16.mxu0 0
    %258 = vmatpush1.bf16.msra.mxu0 %v237
    %259 = vmatprep.subr.bf16.mxu0 0
    %260 = vmatpush1.bf16.msra.mxu0 %v238
    %261 = vmatprep.subr.bf16.mxu0 0
    %262 = vmatpush1.bf16.msra.mxu0 %v239
    %263 = vmatprep.subr.bf16.mxu0 0
    %264 = vmatpush1.bf16.msra.mxu0 %v240
    %265 = vmatprep.subr.bf16.mxu0 0
    %266 = vmatpush1.bf16.msra.mxu0 0
    %267 = vmatprep.subr.bf16.mxu0 0
    %268 = vmatpush1.bf16.msra.mxu0 0
    %269 = vmatprep.subr.bf16.mxu0 0
    %270 = vmatpush1.bf16.msra.mxu0 0
    %271 = vmatprep.subr.bf16.mxu0 0
    %272 = vmatpush1.bf16.msra.mxu0 0
    %273 = vmatprep.subr.bf16.mxu0 0
    %274 = vmatpush1.bf16.msra.mxu0 0
    %275 = vmatprep.subr.bf16.mxu0 0
    %276 = vmatpush1.bf16.msra.mxu0 0
    %277 = vmatprep.subr.bf16.mxu0 0
    %278 = vmatpush1.bf16.msra.mxu0 0
    %279 = vmatprep.subr.bf16.mxu0 0
    %280 = vmatpush1.bf16.msra.mxu0 0
    %281 = vmatprep.mubr.bf16.mxu0 0
    %282 = vmatmul.mubr.bf16.gmra.mrb[0].mxu0 %v64
    %v283 = vpop.f32.mrb[0].mxu0
    %v284 = vadd.f32 %v199, %v283
    %v285 = vpop.f32.mrb[0].mxu0
    %v286 = vpop.f32.mrb[0].mxu0
    %v287 = vpop.f32.mrb[0].mxu0
    %288 = vdwg.mxu0
    %v289 = vmax.f32 %v284, 0.0
    %290 = vst [vmem:[#allocation9] sm:$0xff] %v289
    // Predicated region
    $region34: #{tpu_custom_call.1} parent=1 // pred_check
      _
    $region35: #{tpu_custom_call.1} parent=1 // pred_check_branch
      %292 = sbr.rel (0) target = $region37
    $region36: #{tpu_custom_call.1} parent=1 // pred_region
      %s294 = ssub.s32 128, 128
      %295 = vsyncadd [#allocation4], %s294
      %s297 = sshll.u32 [#allocation8], 4
      %s298 = int_to_ptr.vmem [resolvable:$true] %s297
      %300 = dma.vmem_to_hbm [thread:$0]  %s298, 128, %s5, [#allocation4]
    $region37: #{tpu_custom_call.1} parent=1 // pred_fallthru
      _
    // Predicated region
    $region38: #{tpu_custom_call.1} parent=1 // pred_check
      _
    $region39: #{tpu_custom_call.1} parent=1 // pred_check_branch
      %302 = sbr.rel (0) target = $region41
    $region40: #{tpu_custom_call.1} parent=1 // pred_region
      %s304 = ssub.s32 128, 128
      %305 = vsyncadd [#allocation10], %s304
      %s307 = sshll.u32 [#allocation9], 4
      %s308 = int_to_ptr.vmem [resolvable:$true] %s307
      %310 = dma.vmem_to_hbm [thread:$0]  %s308, 128, %s6, [#allocation10]
    $region41: #{tpu_custom_call.1} parent=1 // pred_fallthru
      _
    // Predicated region
    $region42: #{tpu_custom_call.1} parent=1 // pred_check
      _
    $region43: #{tpu_custom_call.1} parent=1 // pred_check_branch
      %312 = sbr.rel (0) target = $region45
    $region44: #{tpu_custom_call.1} parent=1 // pred_region
      %313 = dma.done [#allocation4], 128
    $region45: #{tpu_custom_call.1} parent=1 // pred_fallthru
      _
    // Predicated region
    $region46: #{tpu_custom_call.1} parent=1 // pred_check
      _
    $region47: #{tpu_custom_call.1} parent=1 // pred_check_branch
      %315 = sbr.rel (0) target = $region49
    $region48: #{tpu_custom_call.1} parent=1 // pred_region
      %316 = dma.done [#allocation10], 128
    $region49: #{tpu_custom_call.1} parent=1 // pred_fallthru
      _
    %317 = vsyncpa [#allocation3], 1
    %318 = vsyncpa [#allocation6], 1
    %319 = vsyncpa [#allocation4], 1
    %320 = vsyncpa [#allocation10], 1

</llo_original>
